<compile_context>
chip_gen: v7x
topology: tpu7x:2x2x1
jax: 0.10.0
libtpu: 0.0.40
codegen_flags: <defaults>
</compile_context>

<pallas_src>
import jax
import jax.numpy as jnp
from jax.experimental import pallas as pl
from jax.experimental.pallas import tpu as pltpu


def _round_up(x, m):
    return ((x + m - 1) // m) * m


def _pipeline_vmem_bytes(tp, cin, ed_p, out_bytes):
    # Double-buffered working set of the pallas_call pipeline.
    return (2 * tp * cin * 2        # bf16 patches tile
            + 2 * cin * ed_p * 2    # bf16 weight (constant block index)
            + 2 * ed_p * 4          # f32 bias
            + 2 * tp * ed_p * out_bytes)  # output tile


def _pick_row_tile(m, cin, ed_p, out_bytes):
    """Largest row tile (<=1024, multiple of 8) within the VMEM budget,
    shrunk for small inputs so the grid keeps >= 2 steps (v7x megacore)."""
    budget = 40 << 20
    tp = 1024
    while tp > 256 and _pipeline_vmem_bytes(tp, cin, ed_p, out_bytes) > budget:
        tp //= 2
    if m < 2 * tp:
        tp = max(8, _round_up(pl.cdiv(m, 2), 8))
    return tp


def patch_embed_kernel(p_ref, w_ref, b_ref, o_ref):
    # p_ref: (TP, Cin)    bf16  im2col patch rows (ragged last block is OK)
    # w_ref: (Cin, Ed_p)  bf16  flattened conv weight (resident; constant idx)
    # b_ref: (1, Ed_p)    f32   conv bias
    # o_ref: (TP, Ed_p)   output tile (f32 by default)
    acc = jnp.dot(p_ref[...], w_ref[...], preferred_element_type=jnp.float32)
    o_ref[...] = (acc + b_ref[...]).astype(o_ref.dtype)


def patch_embed(x_nchw, conv_w, conv_b, *, patch_size, out_dtype=jnp.float32):
    """PatchEmbed forward.

    x_nchw: (B, C, H, W) f32.
    conv_w: (embed_dim, C, ph, pw) f32 (PyTorch nn.Conv2d weight layout).
    conv_b: (embed_dim,) f32.
    Returns (x, (Hp, Wp)) with x: (B, Hp*Wp, embed_dim).
    """
    B, C, H, W = x_nchw.shape
    ph = pw = patch_size
    Hp, Wp = H // ph, W // pw
    Np = Hp * Wp
    Cin = C * ph * pw
    Ed = conv_w.shape[0]
    M = B * Np

    # im2col regroup (bf16 cast + one transpose); XLA fuses this into a single
    # copy pass.  Flat ordering (C, ph, pw) matches the flattened conv weight.
    # TODO(synk): fold the patch extraction into the kernel pipeline (grid over
    # (b, hp) with an NCHW BlockSpec + in-kernel regroup) to remove this pass.
    patches = x_nchw.astype(jnp.bfloat16).reshape(B, C, Hp, ph, Wp, pw)
    patches = patches.transpose(0, 2, 4, 1, 3, 5).reshape(M, Cin)

    # Flattened conv weight (Cin, Ed) with matching (C, ph, pw) ordering.
    w2d = conv_w.reshape(Ed, Cin).T.astype(jnp.bfloat16)
    bias = conv_b.reshape(1, Ed).astype(jnp.float32)

    # Lane-dense output store: pad embed_dim to a multiple of 128 only when it
    # is genuinely misaligned (small weight/bias pads only, never the patches).
    Ed_p = _round_up(Ed, 128)
    if Ed_p != Ed:
        w2d = jnp.pad(w2d, ((0, 0), (0, Ed_p - Ed)))
        bias = jnp.pad(bias, ((0, 0), (0, Ed_p - Ed)))

    out_bytes = jnp.dtype(out_dtype).itemsize
    TP = _pick_row_tile(M, Cin, Ed_p, out_bytes)
    grid = (pl.cdiv(M, TP),)

    vmem_need = _pipeline_vmem_bytes(TP, Cin, Ed_p, out_bytes)
    vmem_limit = int(min(max(vmem_need + (8 << 20), 32 << 20), 64 << 20))

    cost = pl.CostEstimate(
        flops=2 * M * Cin * Ed_p,
        transcendentals=0,
        bytes_accessed=(M * Cin * 2          # bf16 patches in
                        + Cin * Ed_p * 2     # bf16 weight in
                        + Ed_p * 4           # bias in
                        + M * Ed_p * out_bytes),
    )

    out = pl.pallas_call(
        patch_embed_kernel,
        out_shape=jax.ShapeDtypeStruct((M, Ed_p), out_dtype),
        grid_spec=pltpu.PrefetchScalarGridSpec(
            num_scalar_prefetch=0,
            grid=grid,
            in_specs=[
                pl.BlockSpec((TP, Cin), lambda i: (i, 0)),
                pl.BlockSpec((Cin, Ed_p), lambda i: (0, 0)),
                pl.BlockSpec((1, Ed_p), lambda i: (0, 0)),
            ],
            out_specs=pl.BlockSpec((TP, Ed_p), lambda i: (i, 0)),
        ),
        compiler_params=pltpu.CompilerParams(
            dimension_semantics=("parallel",),
            vmem_limit_bytes=vmem_limit),
        cost_estimate=cost,
    )(patches, w2d, bias)

    if Ed_p != Ed:
        out = out[:, :Ed]                      # only when Ed is misaligned
    return out.reshape(B, Np, Ed), (Hp, Wp)


def patch_embed_ref(x_nchw, conv_w, conv_b, *, patch_size,
                    mxu_dtype=jnp.float32):
    """Pure-JAX reference matching the PyTorch forward semantics."""
    B, C, H, W = x_nchw.shape
    ph = pw = patch_size
    Hp, Wp = H // ph, W // pw
    Cin = C * ph * pw
    Ed = conv_w.shape[0]
    patches = x_nchw.astype(mxu_dtype).reshape(B, C, Hp, ph, Wp, pw)
    patches = patches.transpose(0, 2, 4, 1, 3, 5).reshape(B, Hp * Wp, Cin)
    w2d = conv_w.reshape(Ed, Cin).T.astype(mxu_dtype)
    out = jnp.dot(patches, w2d, preferred_element_type=jnp.float32)
    out = out + conv_b.reshape(1, 1, Ed).astype(jnp.float32)
    return out, (Hp, Wp)


if __name__ == "__main__":
    # Small shapes consistent with the module's forward.
    B, C, H, W = 2, 4, 16, 16     # input image (NCHW)
    patch_size = 4                # kernel == stride == patch_size
    embed_dim = 32

    key = jax.random.PRNGKey(0)
    kx, kw, kb = jax.random.split(key, 3)

    x = jax.random.normal(kx, (B, C, H, W), dtype=jnp.float32)
    # Deterministic synthetic Conv2d params (PyTorch layout: (Ed, C, ph, pw)).
    conv_w = jax.random.normal(
        kw, (embed_dim, C, patch_size, patch_size), dtype=jnp.float32) * 0.05
    conv_b = jax.random.normal(kb, (embed_dim,), dtype=jnp.float32) * 0.01

    out, (Hp, Wp) = patch_embed(x, conv_w, conv_b, patch_size=patch_size)
    out = jax.block_until_ready(out)

    assert (Hp, Wp) == (H // patch_size, W // patch_size)
    assert out.shape == (B, Hp * Wp, embed_dim)
    assert out.dtype == jnp.float32

    # Same-path check (bf16 MXU feed, f32 accumulate, same as the kernel).
    ref_bf16, _ = patch_embed_ref(x, conv_w, conv_b, patch_size=patch_size,
                                  mxu_dtype=jnp.bfloat16)
    assert jnp.allclose(out, ref_bf16, atol=1e-4, rtol=1e-4), \
        float(jnp.max(jnp.abs(out - ref_bf16)))

    # Sanity check vs full-f32 PyTorch-equivalent math (bf16 rounding slack).
    ref_f32, _ = patch_embed_ref(x, conv_w, conv_b, patch_size=patch_size,
                                 mxu_dtype=jnp.float32)
    assert jnp.allclose(out, ref_f32, atol=2e-2, rtol=2e-2)

    print("KERNEL_OK")
</pallas_src>

<mosaic_0001>
module attributes {stable_mosaic.version = 11 : i64} {
  func.func @patch_embed_kernel(%arg0: i32, %arg1: memref<16x64xbf16, #tpu.memory_space<vmem>>, %arg2: memref<64x128xbf16, #tpu.memory_space<vmem>>, %arg3: memref<1x128xf32, #tpu.memory_space<vmem>>, %arg4: memref<16x128xf32, #tpu.memory_space<vmem>>) attributes {dimension_semantics = [#tpu.dimension_semantics<parallel>], iteration_bounds = array<i64: 2>, scalar_prefetch = 0 : i64, scratch_operands = 0 : i64, tpu.core_type = #tpu.core_type<tc>, window_params = [{transform_indices = @transform_0, window_bounds = array<i64: 16, 64>}, {pipeline_mode = #tpu.pipeline_mode<synchronous>, transform_indices = @transform_1, window_bounds = array<i64: 64, 128>}, {pipeline_mode = #tpu.pipeline_mode<synchronous>, transform_indices = @transform_2, window_bounds = array<i64: 1, 128>}, {transform_indices = @transform_3, window_bounds = array<i64: 16, 128>}]} {
    %c0 = arith.constant 0 : index
    %c0_0 = arith.constant 0 : index
    %0 = vector.load %arg1[%c0, %c0_0] : memref<16x64xbf16, #tpu.memory_space<vmem>>, vector<16x64xbf16>
    %c0_1 = arith.constant 0 : index
    %c0_2 = arith.constant 0 : index
    %1 = vector.load %arg2[%c0_1, %c0_2] : memref<64x128xbf16, #tpu.memory_space<vmem>>, vector<64x128xbf16>
    %cst = arith.constant dense<0.000000e+00> : vector<16x128xf32>
    %2 = tpu.matmul %0, %1, %cst {dimension_numbers = #tpu.dot_dimension_numbers<[1], [0], [0], [1], [0, 0, 1, 1], [], []>} : vector<16x64xbf16>, vector<64x128xbf16>, vector<16x128xf32> -> vector<16x128xf32>
    %c0_3 = arith.constant 0 : index
    %c0_4 = arith.constant 0 : index
    %3 = vector.load %arg3[%c0_3, %c0_4] : memref<1x128xf32, #tpu.memory_space<vmem>>, vector<1x128xf32>
    %4 = vector.broadcast %3 : vector<1x128xf32> to vector<16x128xf32>
    %5 = arith.addf %2, %4 : vector<16x128xf32>
    %c0_5 = arith.constant 0 : index
    %c0_6 = arith.constant 0 : index
    %6 = vector.load %arg4[%c0_5, %c0_6] : memref<16x128xf32, #tpu.memory_space<vmem>>, vector<16x128xf32>
    tpu.vector_store %arg4[%c0_5, %c0_6], %5 {strides = array<i32>} : memref<16x128xf32, #tpu.memory_space<vmem>>, vector<16x128xf32>,
    return
  }
  func.func @transform_0(%arg0: i32) -> (i32, i32) {
    %c0_i32 = arith.constant 0 : i32
    %c0_i32_0 = arith.constant 0 : i32
    return %arg0, %c0_i32 : i32, i32
  }
  func.func @transform_1(%arg0: i32) -> (i32, i32) {
    %c0_i32 = arith.constant 0 : i32
    %c0_i32_0 = arith.constant 0 : i32
    %c0_i32_1 = arith.constant 0 : i32
    return %c0_i32, %c0_i32_0 : i32, i32
  }
  func.func @transform_2(%arg0: i32) -> (i32, i32) {
    %c0_i32 = arith.constant 0 : i32
    %c0_i32_0 = arith.constant 0 : i32
    %c0_i32_1 = arith.constant 0 : i32
    return %c0_i32, %c0_i32_0 : i32, i32
  }
  func.func @transform_3(%arg0: i32) -> (i32, i32) {
    %c0_i32 = arith.constant 0 : i32
    %c0_i32_0 = arith.constant 0 : i32
    return %arg0, %c0_i32 : i32, i32
  }
}

</mosaic_0001>

<llo_original>
// kernel: tpu_custom_call.1
$region0: #{tpu_custom_call.1}
  #allocation0 [shape = 'u32[]', space=smem, size = 0x4, offset = 0x4, fixed_abs, tag = 'smem constant byte address 0x4 - core index']
  #allocation1 [shape = 'u32[144,128]{1,0:T(1,128)}', space=vmem, size = 0x12000, scoped, tag = 'internal scratch']
  %s0 = inlined_call_operand.hbm [shape: bf16[32,64], index: 0, kind: input, shape index: {}]
  %s1 = inlined_call_operand.hbm [shape: bf16[64,128], index: 1, kind: input, shape index: {}]
  %s2 = inlined_call_operand.vmem [shape: f32[1,128], index: 2, kind: input, shape index: {}]
  %s3 = inlined_call_operand.hbm [shape: f32[32,128], index: 3, kind: output, shape index: {}]
  %s4 = sld [smem:[#allocation0]]
  $region53: #{tpu_custom_call.1} parent=0
    _
  %s6 = ssub.s32 1, %s4
  %s7 = scalar_select 0, %s6, %s4
  $region1: #{tpu_custom_call.1} parent=0
    #allocation2 [shape = 'u8[8192]{0}', space=vmem, size = 0x2000, scoped, tag = 'input window, operand 0']
    #allocation3 [shape = 's32[2]{0}', space=sflag, size = 0x8, scoped, tag = 'scoped memory for tpu_custom_call.1']
    #allocation4 [shape = 's32[2]{0}', space=sflag, size = 0x8, scoped, tag = 'scoped memory for tpu_custom_call.1']
    #allocation5 [shape = 'u8[16384]{0}', space=vmem, size = 0x4000, scoped, tag = 'input window, operand 1, single buffered']
    #allocation6 [shape = 's32[1]{0}', space=sflag, size = 0x4, scoped, tag = 'scoped memory for tpu_custom_call.1']
    #allocation7 [shape = 'u8[16384]{0}', space=vmem, size = 0x4000, scoped, tag = 'output window, operand 0']
    %8 = vsyncpa [#allocation3], 0
    %s9 = scalar_lea.sflag [#allocation3], 1
    %10 = vsyncpa %s9, 0
    %11 = vsyncpa [#allocation6], 0
    %12 = vsyncpa [#allocation4], 0
    %s13 = scalar_lea.sflag [#allocation4], 1
    %14 = vsyncpa %s13, 0
    loop: start=0, step=1, limit=4
    $region2: #{tpu_custom_call.1} parent=1 // loop_pre_header
      _
    $region3: #{tpu_custom_call.1} parent=1 // loop_header
      %s16 = sphi 0, %s20
      %p17 = scmp.ge.s32.totalorder %s16, 4
      %s26 = sphi 0, %s28
      %s29 = sphi 0, %s26
      %s30 = sphi 0, %s29
      %s46 = sphi 0, %s30
      %s50 = sphi 0, %s50
      %s52 = sphi 0, %s50
      %s53 = sphi 0, %s52
      %s67 = sphi 0, %s53
      %s71 = sphi 0, %s71
      %s73 = sphi 0, %s71
      %s74 = sphi 0, %s73
      %s88 = sphi 0, %s74
      %s94 = sphi 0, %s96
      %s97 = sphi 0, %s94
      %s98 = sphi 0, %s97
      %s114 = sphi 0, %s98
    $region4: #{tpu_custom_call.1} parent=1 // loop_header_branch
      %19 = sbr.rel (%p17) target = $region8
    $region5: #{tpu_custom_call.1} parent=1 // loop_body
      %s21 = ssub.s32 %s16, 1
      %s22 = ssub.s32 %s16, 2
      %s23 = sadd.s32 %s16, 1
      %s24 = ssub.s32 %s16, %s23
      %p25 = scmp.eq.s32.totalorder %s24, 0
      %s27 = sadd.s32 %s26, 1
      %s28 = scalar_select %p25, %s26, %s27
      %p31 = pneg %p25
      %p32 = scmp.eq.s32.totalorder %s16, 1
      %p33 = por %p31, %p32
      %p34 = scmp.ne.s32.totalorder %s26, %s29
      %p35 = scmp.eq.s32.totalorder %s16, 0
      %p36 = por %p34, %p35
      %p37 = scmp.ne.s32.totalorder %s26, %s29
      %p38 = scmp.eq.s32.totalorder %s21, 1
      %p39 = por %p37, %p38
      %p40 = scmp.ne.s32.totalorder %s29, %s30
      %p41 = scmp.eq.s32.totalorder %s21, 0
      %p42 = por %p40, %p41
      %p43 = scmp.ne.s32.totalorder %s29, %s30
      %p44 = scmp.eq.s32.totalorder %s22, 1
      %p45 = por %p43, %p44
      %p47 = scmp.ne.s32.totalorder %s30, %s46
      %p48 = scmp.eq.s32.totalorder %s22, 0
      %p49 = por %p47, %p48
      %s51 = sadd.s32 %s50, 1
      %p54 = scmp.eq.s32.totalorder %s16, 1
      %p55 = scmp.ne.s32.totalorder %s50, %s52
      %p56 = scmp.eq.s32.totalorder %s16, 0
      %p57 = por %p55, %p56
      %p58 = scmp.ne.s32.totalorder %s50, %s52
      %p59 = scmp.eq.s32.totalorder %s21, 1
      %p60 = por %p58, %p59
      %p61 = scmp.ne.s32.totalorder %s52, %s53
      %p62 = scmp.eq.s32.totalorder %s21, 0
      %p63 = por %p61, %p62
      %p64 = scmp.ne.s32.totalorder %s52, %s53
      %p65 = scmp.eq.s32.totalorder %s22, 1
      %p66 = por %p64, %p65
      %p68 = scmp.ne.s32.totalorder %s53, %s67
      %p69 = scmp.eq.s32.totalorder %s22, 0
      %p70 = por %p68, %p69
      %s72 = sadd.s32 %s71, 1
      %p75 = scmp.eq.s32.totalorder %s16, 1
      %p76 = scmp.ne.s32.totalorder %s71, %s73
      %p77 = scmp.eq.s32.totalorder %s16, 0
      %p78 = por %p76, %p77
      %p79 = scmp.ne.s32.totalorder %s71, %s73
      %p80 = scmp.eq.s32.totalorder %s21, 1
      %p81 = por %p79, %p80
      %p82 = scmp.ne.s32.totalorder %s73, %s74
      %p83 = scmp.eq.s32.totalorder %s21, 0
      %p84 = por %p82, %p83
      %p85 = scmp.ne.s32.totalorder %s73, %s74
      %p86 = scmp.eq.s32.totalorder %s22, 1
      %p87 = por %p85, %p86
      %p89 = scmp.ne.s32.totalorder %s74, %s88
      %p90 = scmp.eq.s32.totalorder %s22, 0
      %p91 = por %p89, %p90
      %s92 = ssub.s32 %s16, %s23
      %p93 = scmp.eq.s32.totalorder %s92, 0
      %s95 = sadd.s32 %s94, 1
      %s96 = scalar_select %p93, %s94, %s95
      %p99 = pneg %p93
      %p100 = scmp.eq.s32.totalorder %s16, 1
      %p101 = por %p99, %p100
      %p102 = scmp.ne.s32.totalorder %s94, %s97
      %p103 = scmp.eq.s32.totalorder %s16, 0
      %p104 = por %p102, %p103
      %p105 = scmp.ne.s32.totalorder %s94, %s97
      %p106 = scmp.eq.s32.totalorder %s21, 1
      %p107 = por %p105, %p106
      %p108 = scmp.ne.s32.totalorder %s97, %s98
      %p109 = scmp.eq.s32.totalorder %s21, 0
      %p110 = por %p108, %p109
      %p111 = scmp.ne.s32.totalorder %s97, %s98
      %p112 = scmp.eq.s32.totalorder %s22, 1
      %p113 = por %p111, %p112
      %p115 = scmp.ne.s32.totalorder %s98, %s114
      %p116 = scmp.eq.s32.totalorder %s22, 0
      %p117 = por %p115, %p116
      %p118 = scmp.le.s32.totalorder 1, %s16
      %p119 = scmp.lt.s32.totalorder %s16, 3
      %p120 = pnand %p118, %p119
      %p121 = pneg %p120
      // Predicated region
      $region9: #{tpu_custom_call.1} parent=5 // pred_check
        _
      $region10: #{tpu_custom_call.1} parent=5 // pred_check_branch
        %123 = sbr.rel (%p120) target = $region12
      $region11: #{tpu_custom_call.1} parent=5 // pred_region
        %s124 = ssub.s32 %s16, 1
        // Predicated region
        $region13: #{tpu_custom_call.1} parent=11 // pred_check
          %p125 = pneg %p63
        $region14: #{tpu_custom_call.1} parent=11 // pred_check_branch
          %127 = sbr.rel (%p125) target = $region16
        $region15: #{tpu_custom_call.1} parent=11 // pred_region
          %s129 = ssub.s32 512, 512
          %130 = vsyncadd [#allocation6], %s129
          %s131 = sshll.u32 [#allocation5], 4
          %s132 = int_to_ptr.vmem [resolvable:$true] %s131
          %137 = dma.hbm_to_vmem [thread:$0]  %s1, 512, %s132, [#allocation6], 64, 64, 4
        $region16: #{tpu_custom_call.1} parent=11 // pred_fallthru
          _
        // Predicated region
        $region17: #{tpu_custom_call.1} parent=11 // pred_check
          %p138 = pneg %p84
        $region18: #{tpu_custom_call.1} parent=11 // pred_check_branch
          %140 = sbr.rel (%p138) target = $region20
        $region19: #{tpu_custom_call.1} parent=11 // pred_region
          _
        $region20: #{tpu_custom_call.1} parent=11 // pred_fallthru
          _
      $region12: #{tpu_custom_call.1} parent=5 // pred_fallthru
        _
      %p141 = scmp.lt.s32.totalorder %s16, 2
      // Predicated region
      $region21: #{tpu_custom_call.1} parent=5 // pred_check
        %p142 = pneg %p141
      $region22: #{tpu_custom_call.1} parent=5 // pred_check_branch
        %144 = sbr.rel (%p142) target = $region24
      $region23: #{tpu_custom_call.1} parent=5 // pred_region
        // Predicated region
        $region25: #{tpu_custom_call.1} parent=23 // pred_check
          %p145 = pneg %p36
        $region26: #{tpu_custom_call.1} parent=23 // pred_check_branch
          %147 = sbr.rel (%p145) target = $region28
        $region27: #{tpu_custom_call.1} parent=23 // pred_region
          %s148 = sand.u32 %s26, 1
          %s149 = scalar_lea.sflag [#allocation3], %s148
          %s150 = sand.u32 %s26, 1
          %s151 = smul.addr %s150, 8
          %s152 = scalar_lea.vmem [#allocation2], %s151
          %s153 = smul.u32 2, %s16
          %s155 = ssub.s32 128, 128
          %156 = vsyncadd %s149, %s155
          %s157 = smul.addr %s153, 64
          %s158 = scalar_lea.hbm %s0, %s157
          %s159 = sshll.u32 %s152, 4
          %s160 = int_to_ptr.vmem [resolvable:$true] %s159
          %165 = dma.hbm_to_vmem [thread:$0]  %s158, 128, %s160, %s149, 64, 64, 4
        $region28: #{tpu_custom_call.1} parent=23 // pred_fallthru
          _
      $region24: #{tpu_custom_call.1} parent=5 // pred_fallthru
        _
      %p166 = scmp.le.s32.totalorder 1, %s16
      %p167 = scmp.lt.s32.totalorder %s16, 3
      %p168 = pnand %p166, %p167
      %p169 = pneg %p168
      // Predicated region
      $region29: #{tpu_custom_call.1} parent=5 // pred_check
        _
      $region30: #{tpu_custom_call.1} parent=5 // pred_check_branch
        %171 = sbr.rel (%p168) target = $region32
      $region31: #{tpu_custom_call.1} parent=5 // pred_region
        %s172 = ssub.s32 %s16, 1
        %s173 = sand.u32 %s29, 1
        %s174 = scalar_lea.sflag [#allocation3], %s173
        %s175 = sand.u32 %s29, 1
        %s176 = smul.addr %s175, 8
        %s177 = scalar_lea.vmem [#allocation2], %s176
        // Predicated region
        $region33: #{tpu_custom_call.1} parent=31 // pred_check
          %p178 = pneg %p42
        $region34: #{tpu_custom_call.1} parent=31 // pred_check_branch
          %180 = sbr.rel (%p178) target = $region36
        $region35: #{tpu_custom_call.1} parent=31 // pred_region
          %181 = dma.done %s174, 128
        $region36: #{tpu_custom_call.1} parent=31 // pred_fallthru
          _
        // Predicated region
        $region37: #{tpu_custom_call.1} parent=31 // pred_check
          %p182 = pneg %p63
        $region38: #{tpu_custom_call.1} parent=31 // pred_check_branch
          %184 = sbr.rel (%p182) target = $region40
        $region39: #{tpu_custom_call.1} parent=31 // pred_region
          %185 = dma.done [#allocation6], 512
        $region40: #{tpu_custom_call.1} parent=31 // pred_fallthru
          _
        %s186 = sand.u32 %s29, 1
        %s187 = scalar_lea.sflag [#allocation3], %s186
        %s188 = sand.u32 %s29, 1
        %s189 = smul.addr %s188, 8
        %s190 = scalar_lea.vmem [#allocation2], %s189
        %p191 = pneg %p42
        %p192 = pneg %p39
        %p193 = pneg %p63
        %p194 = pneg %p60
        %p195 = pneg %p84
        %p196 = pneg %p81
        %p197 = pneg %p110
        %p198 = pneg %p107
        %s199 = sand.u32 %s97, 1
        %s200 = scalar_lea.sflag [#allocation4], %s199
        %s201 = sand.u32 %s97, 1
        %s202 = smul.addr %s201, 16
        %s203 = scalar_lea.vmem [#allocation7], %s202
        %s204 = smul.u32 2, %s21
        %s205 = smul.u32 2, %s21
        %v207 = vld [vmem:[%s177] sm:$0xf]
        %v208 = vld [vmem:[%s177 + $0x4] sm:$0xf]
        %v209 = vld [vmem:[#allocation5] sm:$0xf]
        %v210 = vld [vmem:[#allocation5 + $0x4] sm:$0xf]
        %v211 = vld [vmem:[#allocation5 + $0x8] sm:$0xf]
        %v212 = vld [vmem:[#allocation5 + $0xc] sm:$0xf]
        %v213 = vld [vmem:[#allocation5 + $0x10] sm:$0xf]
        %v214 = vld [vmem:[#allocation5 + $0x14] sm:$0xf]
        %v215 = vld [vmem:[#allocation5 + $0x18] sm:$0xf]
        %v216 = vld [vmem:[#allocation5 + $0x1c] sm:$0xf]
        %v217 = vld [vmem:[%s2] sm:$0x1]
        %v219 = vlaneseq
        %v220 = vshrl.u32 %v219, 7
        %v221 = vsub.s32 0, %v220
        %v222 = vrot.slane %v217, %v221
        %v226 = vunpack.c.l.b16 %v207
        %v227 = vunpack.c.l.b16 %v208
        %v228 = vpack.c.b16 %v227, %v226
        %v237 = vunpack.c.l.b16 %v209
        %v238 = vunpack.c.l.b16 %v210
        %v239 = vunpack.c.l.b16 %v211
        %v240 = vunpack.c.l.b16 %v212
        %v241 = vunpack.c.l.b16 %v213
        %v242 = vunpack.c.l.b16 %v214
        %v243 = vunpack.c.l.b16 %v215
        %v244 = vunpack.c.l.b16 %v216
        %v245 = vpack.c.b16 %v238, %v237
        %v246 = vpack.c.b16 %v240, %v239
        %v247 = vpack.c.b16 %v242, %v241
        %v248 = vpack.c.b16 %v244, %v243
        %vm253 = vcmask 523264
        %v255 = vsel %vm253, %v228, 0
        %257 = vmatprep.subr.bf16.mxu0 0
        %258 = vmatpush1.bf16.msra.mxu0 %v245
        %259 = vmatprep.subr.bf16.mxu0 0
        %260 = vmatpush1.bf16.msra.mxu0 %v246
        %261 = vmatprep.subr.bf16.mxu0 0
        %262 = vmatpush1.bf16.msra.mxu0 %v247
        %263 = vmatprep.subr.bf16.mxu0 0
        %264 = vmatpush1.bf16.msra.mxu0 %v248
        %265 = vmatprep.subr.bf16.mxu0 0
        %266 = vmatpush1.bf16.msra.mxu0 0
        %267 = vmatprep.subr.bf16.mxu0 0
        %268 = vmatpush1.bf16.msra.mxu0 0
        %269 = vmatprep.subr.bf16.mxu0 0
        %270 = vmatpush1.bf16.msra.mxu0 0
        %271 = vmatprep.subr.bf16.mxu0 0
        %272 = vmatpush1.bf16.msra.mxu0 0
        %273 = vmatprep.subr.bf16.mxu0 0
        %274 = vmatpush1.bf16.msra.mxu0 0
        %275 = vmatprep.subr.bf16.mxu0 0
        %276 = vmatpush1.bf16.msra.mxu0 0
        %277 = vmatprep.subr.bf16.mxu0 0
        %278 = vmatpush1.bf16.msra.mxu0 0
        %279 = vmatprep.subr.bf16.mxu0 0
        %280 = vmatpush1.bf16.msra.mxu0 0
        %281 = vmatprep.subr.bf16.mxu0 0
        %282 = vmatpush1.bf16.msra.mxu0 0
        %283 = vmatprep.subr.bf16.mxu0 0
        %284 = vmatpush1.bf16.msra.mxu0 0
        %285 = vmatprep.subr.bf16.mxu0 0
        %286 = vmatpush1.bf16.msra.mxu0 0
        %287 = vmatprep.subr.bf16.mxu0 0
        %288 = vmatpush1.bf16.msra.mxu0 0
        %289 = vmatprep.mubr.bf16.mxu0 0
        %290 = vmatmul.mubr.bf16.gmra.mrb[0].mxu0 %v255
        %v291 = vpop.f32.mrb[0].mxu0
        %v292 = vadd.f32 %v222, %v291
        %v293 = vpop.f32.mrb[0].mxu0
        %v294 = vpop.f32.mrb[0].mxu0
        %v295 = vadd.f32 %v222, %v294
        %v296 = vpop.f32.mrb[0].mxu0
        %297 = vdwg.mxu0
        %298 = vst [vmem:[%s203] sm:$0xff] %v292
        %299 = vst [vmem:[%s203 + $0x8] sm:$0xff] %v295
        %s300 = sand.u32 %s97, 1
        %s301 = scalar_lea.sflag [#allocation4], %s300
        %s302 = sand.u32 %s97, 1
        %s303 = smul.addr %s302, 16
        %s304 = scalar_lea.vmem [#allocation7], %s303
        // Predicated region
        $region41: #{tpu_custom_call.1} parent=31 // pred_check
          %p305 = pneg %p107
        $region42: #{tpu_custom_call.1} parent=31 // pred_check_branch
          %307 = sbr.rel (%p305) target = $region44
        $region43: #{tpu_custom_call.1} parent=31 // pred_region
          %s308 = smul.u32 2, %s21
          %s310 = ssub.s32 256, 256
          %311 = vsyncadd %s301, %s310
          %s312 = smul.addr %s308, 128
          %s313 = scalar_lea.hbm %s3, %s312
          %s314 = sshll.u32 %s304, 4
          %s315 = int_to_ptr.vmem [resolvable:$true] %s314
          %320 = dma.vmem_to_hbm [thread:$0]  %s315, 256, %s313, %s301, 128, 128, 8
        $region44: #{tpu_custom_call.1} parent=31 // pred_fallthru
          _
      $region32: #{tpu_custom_call.1} parent=5 // pred_fallthru
        _
      %p321 = scmp.le.s32.totalorder 2, %s16
      // Predicated region
      $region45: #{tpu_custom_call.1} parent=5 // pred_check
        %p322 = pneg %p321
      $region46: #{tpu_custom_call.1} parent=5 // pred_check_branch
        %324 = sbr.rel (%p322) target = $region48
      $region47: #{tpu_custom_call.1} parent=5 // pred_region
        %s325 = ssub.s32 %s16, 2
        // Predicated region
        $region49: #{tpu_custom_call.1} parent=47 // pred_check
          %p326 = pneg %p113
        $region50: #{tpu_custom_call.1} parent=47 // pred_check_branch
          %328 = sbr.rel (%p326) target = $region52
        $region51: #{tpu_custom_call.1} parent=47 // pred_region
          %s329 = sand.u32 %s98, 1
          %s330 = scalar_lea.sflag [#allocation4], %s329
          %s331 = sand.u32 %s98, 1
          %s332 = smul.addr %s331, 16
          %s333 = scalar_lea.vmem [#allocation7], %s332
          %334 = dma.done %s330, 256
        $region52: #{tpu_custom_call.1} parent=47 // pred_fallthru
          _
      $region48: #{tpu_custom_call.1} parent=5 // pred_fallthru
        _
    $region6: #{tpu_custom_call.1} parent=1 // loop_footer
      %s20 = sadd.s32 1, %s16
    $region7: #{tpu_custom_call.1} parent=1 // loop_footer_branch
      %15 = sbr.rel target = $region3
    $region8: #{tpu_custom_call.1} parent=1 // loop_exit
      _
    %335 = vsyncpa [#allocation3], 1
    %s336 = scalar_lea.sflag [#allocation3], 1
    %337 = vsyncpa %s336, 1
    %338 = vsyncpa [#allocation6], 1
    %339 = vsyncpa [#allocation4], 1
    %s340 = scalar_lea.sflag [#allocation4], 1
    %341 = vsyncpa %s340, 1

</llo_original>
